<compile_context>
chip_gen: v5e
topology: v5e:2x2
jax: 0.10.0
libtpu: 0.0.40
codegen_flags: <defaults>
</compile_context>

<pallas_src>
import functools

import jax
import jax.numpy as jnp
from jax import lax
from jax.experimental import pallas as pl
from jax.experimental.pallas import tpu as pltpu


def ttpnet_head_kernel(h_ref, w1_ref, b1_ref, w2_ref, b2_ref, w3_ref, b3_ref,
                       o_ref, *, n):
    R, D = h_ref.shape            # R = TB * n rows (batch-major, seq-minor)
    TB = R // n

    # ---- per-batch inclusive prefix sum over the sequence axis --------------
    # Hillis-Steele log-step scan on the flat (TB*n, D) block: sublane rolls on
    # the XLU + masked VPU adds.  The (row % n) >= shift mask keeps each
    # running sum inside its own length-n batch block (and kills roll wrap).
    x = h_ref[...].astype(jnp.float32)
    pos = lax.broadcasted_iota(jnp.int32, (R, 1), 0) % n
    shift = 1
    while shift < n:                                    # static, unrolled
        shifted = pltpu.roll(x, shift, axis=0)          # row i <- row i-shift
        x = x + jnp.where(pos >= shift, shifted, 0.0)
        shift *= 2

    # ---- MLP head on all TB*n rows (MXU matmuls, f32 accumulation) ----------
    cs = x.astype(w1_ref.dtype)
    x = jnp.dot(cs, w1_ref[...], preferred_element_type=jnp.float32) + b1_ref[...]
    x = jnp.maximum(x, 0.0)
    x = jnp.dot(x.astype(w2_ref.dtype), w2_ref[...],
                preferred_element_type=jnp.float32) + b2_ref[...]
    x = jnp.maximum(x, 0.0)                             # (TB*n, 64) f32

    # Final Linear(64, 1) as VPU multiply + lane reduction; dense (TB, n) tile
    # (batch on sublanes, sequence on lanes).
    out = jnp.sum(x.reshape(TB, n, 64) * w3_ref[...], axis=-1) + b3_ref[...]
    o_ref[...] = out.astype(o_ref.dtype)


def ttpnet_forward(hiddens, params, *, tb=256):
    """hiddens: (B, n, 128).  Returns (B, n-1, 1) float32 (matches PyTorch)."""
    B, n, D = hiddens.shape
    assert D == 128
    w1, b1, w2, b2, w3, b3 = params

    TB = min(tb, B)
    if TB == B and B >= 16:
        # Keep >=2 grid steps so the batch axis can shard across TensorCores
        # on multi-core parts (v7x); single-TC chips are unaffected.
        TB = min(B, ((B + 1) // 2 + 7) // 8 * 8)
    B_pad = -(-B // TB) * TB
    if B_pad != B:
        hiddens = jnp.pad(hiddens, ((0, B_pad - B), (0, 0), (0, 0)))

    # Pre-flatten so the kernel block is a plain (TB*n, 128) slab (trivially
    # (8,128)-tiled DMA; no in-kernel merge reshape).
    h_flat = hiddens.reshape(B_pad * n, D)

    grid = (B_pad // TB,)
    scan_steps = max(1, (n - 1).bit_length())
    flops = 2 * B_pad * n * (D * 128 + 128 * 64 + 64) + B_pad * n * D * scan_steps
    bytes_accessed = (h_flat.size * h_flat.dtype.itemsize
                      + B_pad * n * 4
                      + sum(int(p.size) * p.dtype.itemsize for p in params))

    out2d = pl.pallas_call(
        functools.partial(ttpnet_head_kernel, n=n),
        out_shape=jax.ShapeDtypeStruct((B_pad, n), jnp.float32),
        grid_spec=pltpu.PrefetchScalarGridSpec(
            num_scalar_prefetch=0,
            grid=grid,
            in_specs=[
                pl.BlockSpec((TB * n, D), lambda b: (b, 0)),   # hiddens (flat)
                pl.BlockSpec((D, 128), lambda b: (0, 0)),      # W1 (in, out)
                pl.BlockSpec((1, 128), lambda b: (0, 0)),      # b1
                pl.BlockSpec((128, 64), lambda b: (0, 0)),     # W2
                pl.BlockSpec((1, 64), lambda b: (0, 0)),       # b2
                pl.BlockSpec((1, 64), lambda b: (0, 0)),       # W3 (row)
                pl.BlockSpec((1, 1), lambda b: (0, 0)),        # b3
            ],
            out_specs=pl.BlockSpec((TB, n), lambda b: (b, 0)),
        ),
        compiler_params=pltpu.CompilerParams(
            dimension_semantics=("parallel",),
            vmem_limit_bytes=48 * 1024 * 1024),
        cost_estimate=pl.CostEstimate(
            flops=flops, transcendentals=0, bytes_accessed=bytes_accessed),
    )(h_flat, w1, b1, w2, b2, w3, b3)

    # PyTorch stacks prefix sums of lengths 2..n-1 plus the full sum == cs[:, 1:].
    return out2d[:B, 1:][..., None]                      # (B, n-1, 1)


def init_params(key):
    """Deterministic init for the three Linear layers (weights stored (in,out),
    final weight stored as a (1, 64) row)."""
    k1, k2, k3, k4, k5, k6 = jax.random.split(key, 6)

    def u(k, shape, fan_in):
        bound = 1.0 / jnp.sqrt(fan_in)
        return jax.random.uniform(k, shape, jnp.float32, -bound, bound)

    w1 = u(k1, (128, 128), 128.0)     # input2hid
    b1 = u(k2, (1, 128), 128.0)
    w2 = u(k3, (128, 64), 128.0)      # hid2hid
    b2 = u(k4, (1, 64), 128.0)
    w3 = u(k5, (1, 64), 64.0)         # hid2out weight row
    b3 = u(k6, (1, 1), 64.0)
    return (w1, b1, w2, b2, w3, b3)


def ttpnet_forward_ref(hiddens, params):
    """Plain-JAX reference mirroring the PyTorch forward."""
    w1, b1, w2, b2, w3, b3 = params
    cs = jnp.cumsum(hiddens.astype(jnp.float32), axis=1)
    h_f = cs[:, 1:, :]                                   # (B, n-1, 128)
    x = jnp.maximum(h_f @ w1 + b1, 0.0)
    x = jnp.maximum(x @ w2 + b2, 0.0)
    x = jnp.sum(x * w3, axis=-1, keepdims=True) + b3
    return x


if __name__ == "__main__":
    key = jax.random.PRNGKey(0)
    k_h, k_p = jax.random.split(key)

    B, n, D = 2, 8, 128
    hiddens = jax.random.normal(k_h, (B, n, D), jnp.float32)
    params = init_params(k_p)

    out = jax.block_until_ready(ttpnet_forward(hiddens, params))

    ref = ttpnet_forward_ref(hiddens, params)
    assert out.shape == (B, n - 1, 1), out.shape
    assert jnp.allclose(out, ref, atol=1e-4, rtol=1e-4), (
        float(jnp.max(jnp.abs(out - ref))))

    print("KERNEL_OK")
</pallas_src>

<mosaic_0001>
module attributes {stable_mosaic.version = 11 : i64} {
  func.func @ttpnet_head_kernel(%arg0: i32, %arg1: memref<16x128xf32, #tpu.memory_space<vmem>>, %arg2: memref<128x128xf32, #tpu.memory_space<vmem>>, %arg3: memref<1x128xf32, #tpu.memory_space<vmem>>, %arg4: memref<128x64xf32, #tpu.memory_space<vmem>>, %arg5: memref<1x64xf32, #tpu.memory_space<vmem>>, %arg6: memref<1x64xf32, #tpu.memory_space<vmem>>, %arg7: memref<1x1xf32, #tpu.memory_space<vmem>>, %arg8: memref<2x8xf32, #tpu.memory_space<vmem>>) attributes {dimension_semantics = [#tpu.dimension_semantics<parallel>], iteration_bounds = array<i64: 1>, scalar_prefetch = 0 : i64, scratch_operands = 0 : i64, tpu.core_type = #tpu.core_type<tc>, window_params = [{transform_indices = @transform_0, window_bounds = array<i64: 16, 128>}, {pipeline_mode = #tpu.pipeline_mode<synchronous>, transform_indices = @transform_1, window_bounds = array<i64: 128, 128>}, {pipeline_mode = #tpu.pipeline_mode<synchronous>, transform_indices = @transform_2, window_bounds = array<i64: 1, 128>}, {pipeline_mode = #tpu.pipeline_mode<synchronous>, transform_indices = @transform_3, window_bounds = array<i64: 128, 64>}, {pipeline_mode = #tpu.pipeline_mode<synchronous>, transform_indices = @transform_4, window_bounds = array<i64: 1, 64>}, {pipeline_mode = #tpu.pipeline_mode<synchronous>, transform_indices = @transform_5, window_bounds = array<i64: 1, 64>}, {pipeline_mode = #tpu.pipeline_mode<synchronous>, transform_indices = @transform_6, window_bounds = array<i64: 1, 1>}, {transform_indices = @transform_7, window_bounds = array<i64: 2, 8>}]} {
    %c0 = arith.constant 0 : index
    %c0_0 = arith.constant 0 : index
    %0 = vector.load %arg1[%c0, %c0_0] : memref<16x128xf32, #tpu.memory_space<vmem>>, vector<16x128xf32>
    %1 = tpu.iota {dimensions = array<i32: 0>} : vector<16x1xi32>
    %c8_i32 = arith.constant 8 : i32
    %c0_i32 = arith.constant 0 : i32
    %2 = arith.cmpi eq, %c8_i32, %c0_i32 : i32
    %c1_i32 = arith.constant 1 : i32
    %3 = arith.select %2, %c1_i32, %c8_i32 : i32
    %4 = vector.broadcast %3 : i32 to vector<16x1xi32>
    %5 = arith.remsi %1, %4 : vector<16x1xi32>
    %c0_i32_1 = arith.constant 0 : i32
    %6 = vector.broadcast %c0_i32_1 : i32 to vector<16x1xi32>
    %7 = arith.cmpi ne, %5, %6 : vector<16x1xi32>
    %c0_i32_2 = arith.constant 0 : i32
    %8 = vector.broadcast %c0_i32_2 : i32 to vector<16x1xi32>
    %9 = arith.cmpi slt, %5, %8 : vector<16x1xi32>
    %c0_i32_3 = arith.constant 0 : i32
    %10 = arith.cmpi slt, %3, %c0_i32_3 : i32
    %11 = vector.broadcast %10 : i1 to vector<16x1xi1>
    %12 = vector.broadcast %11 : vector<16x1xi1> to vector<16x1xi1>
    %13 = arith.xori %9, %12 : vector<16x1xi1>
    %14 = arith.andi %13, %7 : vector<16x1xi1>
    %15 = vector.broadcast %3 : i32 to vector<16x1xi32>
    %16 = arith.addi %5, %15 : vector<16x1xi32>
    %17 = arith.select %14, %16, %5 : vector<16x1xi1>, vector<16x1xi32>
    %c1_i32_4 = arith.constant 1 : i32
    %18 = tpu.dynamic_rotate %0 by %c1_i32_4 dim 0 : vector<16x128xf32>, i32 -> vector<16x128xf32>
    %c1_i32_5 = arith.constant 1 : i32
    %19 = vector.broadcast %c1_i32_5 : i32 to vector<16x1xi32>
    %20 = arith.cmpi sge, %17, %19 : vector<16x1xi32>
    %cst = arith.constant 0.000000e+00 : f32
    %21 = vector.shape_cast %20 : vector<16x1xi1> to vector<16x1xi1>
    %22 = vector.broadcast %21 : vector<16x1xi1> to vector<16x128xi1>
    %23 = vector.broadcast %cst : f32 to vector<16x128xf32>
    %24 = arith.select %22, %18, %23 : vector<16x128xi1>, vector<16x128xf32>
    %25 = arith.addf %0, %24 : vector<16x128xf32>
    %c2_i32 = arith.constant 2 : i32
    %26 = tpu.dynamic_rotate %25 by %c2_i32 dim 0 : vector<16x128xf32>, i32 -> vector<16x128xf32>
    %c2_i32_6 = arith.constant 2 : i32
    %27 = vector.broadcast %c2_i32_6 : i32 to vector<16x1xi32>
    %28 = arith.cmpi sge, %17, %27 : vector<16x1xi32>
    %cst_7 = arith.constant 0.000000e+00 : f32
    %29 = vector.shape_cast %28 : vector<16x1xi1> to vector<16x1xi1>
    %30 = vector.broadcast %29 : vector<16x1xi1> to vector<16x128xi1>
    %31 = vector.broadcast %cst_7 : f32 to vector<16x128xf32>
    %32 = arith.select %30, %26, %31 : vector<16x128xi1>, vector<16x128xf32>
    %33 = arith.addf %25, %32 : vector<16x128xf32>
    %c4_i32 = arith.constant 4 : i32
    %34 = tpu.dynamic_rotate %33 by %c4_i32 dim 0 : vector<16x128xf32>, i32 -> vector<16x128xf32>
    %c4_i32_8 = arith.constant 4 : i32
    %35 = vector.broadcast %c4_i32_8 : i32 to vector<16x1xi32>
    %36 = arith.cmpi sge, %17, %35 : vector<16x1xi32>
    %cst_9 = arith.constant 0.000000e+00 : f32
    %37 = vector.shape_cast %36 : vector<16x1xi1> to vector<16x1xi1>
    %38 = vector.broadcast %37 : vector<16x1xi1> to vector<16x128xi1>
    %39 = vector.broadcast %cst_9 : f32 to vector<16x128xf32>
    %40 = arith.select %38, %34, %39 : vector<16x128xi1>, vector<16x128xf32>
    %41 = arith.addf %33, %40 : vector<16x128xf32>
    %c0_10 = arith.constant 0 : index
    %c0_11 = arith.constant 0 : index
    %42 = vector.load %arg2[%c0_10, %c0_11] : memref<128x128xf32, #tpu.memory_space<vmem>>, vector<128x128xf32>
    %cst_12 = arith.constant dense<0.000000e+00> : vector<16x128xf32>
    %43 = tpu.matmul %41, %42, %cst_12 {dimension_numbers = #tpu.dot_dimension_numbers<[1], [0], [0], [1], [0, 0, 1, 1], [], []>} : vector<16x128xf32>, vector<128x128xf32>, vector<16x128xf32> -> vector<16x128xf32>
    %c0_13 = arith.constant 0 : index
    %c0_14 = arith.constant 0 : index
    %44 = vector.load %arg3[%c0_13, %c0_14] : memref<1x128xf32, #tpu.memory_space<vmem>>, vector<1x128xf32>
    %45 = vector.broadcast %44 : vector<1x128xf32> to vector<16x128xf32>
    %46 = arith.addf %43, %45 : vector<16x128xf32>
    %cst_15 = arith.constant 0.000000e+00 : f32
    %47 = vector.broadcast %cst_15 : f32 to vector<16x128xf32>
    %48 = arith.maximumf %46, %47 : vector<16x128xf32>
    %c0_16 = arith.constant 0 : index
    %c0_17 = arith.constant 0 : index
    %49 = vector.load %arg4[%c0_16, %c0_17] : memref<128x64xf32, #tpu.memory_space<vmem>>, vector<128x64xf32>
    %cst_18 = arith.constant dense<0.000000e+00> : vector<16x64xf32>
    %50 = tpu.matmul %48, %49, %cst_18 {dimension_numbers = #tpu.dot_dimension_numbers<[1], [0], [0], [1], [0, 0, 1, 1], [], []>} : vector<16x128xf32>, vector<128x64xf32>, vector<16x64xf32> -> vector<16x64xf32>
    %c0_19 = arith.constant 0 : index
    %c0_20 = arith.constant 0 : index
    %51 = vector.load %arg5[%c0_19, %c0_20] : memref<1x64xf32, #tpu.memory_space<vmem>>, vector<1x64xf32>
    %52 = vector.broadcast %51 : vector<1x64xf32> to vector<16x64xf32>
    %53 = arith.addf %50, %52 : vector<16x64xf32>
    %cst_21 = arith.constant 0.000000e+00 : f32
    %54 = vector.broadcast %cst_21 : f32 to vector<16x64xf32>
    %55 = arith.maximumf %53, %54 : vector<16x64xf32>
    %56 = vector.shape_cast %55 : vector<16x64xf32> to vector<2x8x64xf32>
    %c0_22 = arith.constant 0 : index
    %c0_23 = arith.constant 0 : index
    %57 = vector.load %arg6[%c0_22, %c0_23] : memref<1x64xf32, #tpu.memory_space<vmem>>, vector<1x64xf32>
    %58 = vector.shape_cast %57 : vector<1x64xf32> to vector<1x1x64xf32>
    %59 = vector.broadcast %58 : vector<1x1x64xf32> to vector<2x8x64xf32>
    %60 = arith.mulf %56, %59 : vector<2x8x64xf32>
    %cst_24 = arith.constant dense<0.000000e+00> : vector<2x8xf32>
    %61 = vector.multi_reduction <add>, %60, %cst_24 [2] : vector<2x8x64xf32> to vector<2x8xf32>
    %c0_25 = arith.constant 0 : index
    %c0_26 = arith.constant 0 : index
    %62 = vector.load %arg7[%c0_25, %c0_26] : memref<1x1xf32, #tpu.memory_space<vmem>>, vector<1x1xf32>
    %63 = vector.broadcast %62 : vector<1x1xf32> to vector<2x8xf32>
    %64 = arith.addf %61, %63 : vector<2x8xf32>
    %c0_27 = arith.constant 0 : index
    %c0_28 = arith.constant 0 : index
    %65 = vector.load %arg8[%c0_27, %c0_28] : memref<2x8xf32, #tpu.memory_space<vmem>>, vector<2x8xf32>
    tpu.vector_store %arg8[%c0_27, %c0_28], %64 {strides = array<i32>} : memref<2x8xf32, #tpu.memory_space<vmem>>, vector<2x8xf32>,
    return
  }
  func.func @transform_0(%arg0: i32) -> (i32, i32) {
    %c0_i32 = arith.constant 0 : i32
    %c0_i32_0 = arith.constant 0 : i32
    return %arg0, %c0_i32 : i32, i32
  }
  func.func @transform_1(%arg0: i32) -> (i32, i32) {
    %c0_i32 = arith.constant 0 : i32
    %c0_i32_0 = arith.constant 0 : i32
    %c0_i32_1 = arith.constant 0 : i32
    return %c0_i32, %c0_i32_0 : i32, i32
  }
  func.func @transform_2(%arg0: i32) -> (i32, i32) {
    %c0_i32 = arith.constant 0 : i32
    %c0_i32_0 = arith.constant 0 : i32
    %c0_i32_1 = arith.constant 0 : i32
    return %c0_i32, %c0_i32_0 : i32, i32
  }
  func.func @transform_3(%arg0: i32) -> (i32, i32) {
    %c0_i32 = arith.constant 0 : i32
    %c0_i32_0 = arith.constant 0 : i32
    %c0_i32_1 = arith.constant 0 : i32
    return %c0_i32, %c0_i32_0 : i32, i32
  }
  func.func @transform_4(%arg0: i32) -> (i32, i32) {
    %c0_i32 = arith.constant 0 : i32
    %c0_i32_0 = arith.constant 0 : i32
    %c0_i32_1 = arith.constant 0 : i32
    return %c0_i32, %c0_i32_0 : i32, i32
  }
  func.func @transform_5(%arg0: i32) -> (i32, i32) {
    %c0_i32 = arith.constant 0 : i32
    %c0_i32_0 = arith.constant 0 : i32
    %c0_i32_1 = arith.constant 0 : i32
    return %c0_i32, %c0_i32_0 : i32, i32
  }
  func.func @transform_6(%arg0: i32) -> (i32, i32) {
    %c0_i32 = arith.constant 0 : i32
    %c0_i32_0 = arith.constant 0 : i32
    %c0_i32_1 = arith.constant 0 : i32
    return %c0_i32, %c0_i32_0 : i32, i32
  }
  func.func @transform_7(%arg0: i32) -> (i32, i32) {
    %c0_i32 = arith.constant 0 : i32
    %c0_i32_0 = arith.constant 0 : i32
    return %arg0, %c0_i32 : i32, i32
  }
}

</mosaic_0001>

<llo_original>
// kernel: tpu_custom_call.1
$region0: #{tpu_custom_call.1}
  #allocation0 [shape = 'u32[]', space=smem, size = 0x4, offset = 0x4, fixed_abs, tag = 'smem constant byte address 0x4 - core index']
  #allocation1 [shape = 'u32[72,128]{1,0:T(1,128)}', space=vmem, size = 0x9000, scoped, tag = 'internal scratch']
  #allocation2 [shape = 'f32[1,1]{1,0:T(1,128)S(1)}', space=vmem, size = 0x200, scoped, tag = 'scoped memory for tpu_custom_call.1']
  %s0 = inlined_call_operand.vmem [shape: f32[16,128], index: 0, kind: input, shape index: {}]
  %s1 = inlined_call_operand.vmem [shape: f32[128,128], index: 1, kind: input, shape index: {}]
  %s2 = inlined_call_operand.vmem [shape: f32[1,128], index: 2, kind: input, shape index: {}]
  %s3 = inlined_call_operand.vmem [shape: f32[128,64], index: 3, kind: input, shape index: {}]
  %s4 = inlined_call_operand.vmem [shape: f32[1,64], index: 4, kind: input, shape index: {}]
  %s5 = inlined_call_operand.vmem [shape: f32[1,64], index: 5, kind: input, shape index: {}]
  %s6 = inlined_call_operand.<no memory space> [shape: f32[1,1], index: 6, kind: input, shape index: {}]
  %s7 = inlined_call_operand.hbm [shape: f32[2,8], index: 7, kind: output, shape index: {}]
  %s8 = sld [smem:[#allocation0]]
  $region38: #{tpu_custom_call.1} parent=0
    _
  %s10 = ssub.s32 1, %s8
  %s11 = scalar_select 0, %s10, %s8
  %v12 = vstv %s6
  %13 = vst [vmem:[#allocation2] sm:$0x1] %v12
  $region1: #{tpu_custom_call.1} parent=0
    #allocation3 [shape = 'u8[1024]{0}', space=vmem, size = 0x400, scoped, tag = 'output window, operand 0, single buffered']
    #allocation4 [shape = 's32[1]{0}', space=sflag, size = 0x4, scoped, tag = 'scoped memory for tpu_custom_call.1']
    %14 = vsyncpa [#allocation4], 0
    // Predicated region
    $region2: #{tpu_custom_call.1} parent=1 // pred_check
      _
    $region3: #{tpu_custom_call.1} parent=1 // pred_check_branch
      %16 = sbr.rel (0) target = $region5
    $region4: #{tpu_custom_call.1} parent=1 // pred_region
      _
    $region5: #{tpu_custom_call.1} parent=1 // pred_fallthru
      _
    // Predicated region
    $region6: #{tpu_custom_call.1} parent=1 // pred_check
      _
    $region7: #{tpu_custom_call.1} parent=1 // pred_check_branch
      %18 = sbr.rel (0) target = $region9
    $region8: #{tpu_custom_call.1} parent=1 // pred_region
      _
    $region9: #{tpu_custom_call.1} parent=1 // pred_fallthru
      _
    // Predicated region
    $region10: #{tpu_custom_call.1} parent=1 // pred_check
      _
    $region11: #{tpu_custom_call.1} parent=1 // pred_check_branch
      %20 = sbr.rel (0) target = $region13
    $region12: #{tpu_custom_call.1} parent=1 // pred_region
      _
    $region13: #{tpu_custom_call.1} parent=1 // pred_fallthru
      _
    // Predicated region
    $region14: #{tpu_custom_call.1} parent=1 // pred_check
      _
    $region15: #{tpu_custom_call.1} parent=1 // pred_check_branch
      %22 = sbr.rel (0) target = $region17
    $region16: #{tpu_custom_call.1} parent=1 // pred_region
      _
    $region17: #{tpu_custom_call.1} parent=1 // pred_fallthru
      _
    // Predicated region
    $region18: #{tpu_custom_call.1} parent=1 // pred_check
      _
    $region19: #{tpu_custom_call.1} parent=1 // pred_check_branch
      %24 = sbr.rel (0) target = $region21
    $region20: #{tpu_custom_call.1} parent=1 // pred_region
      _
    $region21: #{tpu_custom_call.1} parent=1 // pred_fallthru
      _
    // Predicated region
    $region22: #{tpu_custom_call.1} parent=1 // pred_check
      _
    $region23: #{tpu_custom_call.1} parent=1 // pred_check_branch
      %26 = sbr.rel (0) target = $region25
    $region24: #{tpu_custom_call.1} parent=1 // pred_region
      _
    $region25: #{tpu_custom_call.1} parent=1 // pred_fallthru
      _
    // Predicated region
    $region26: #{tpu_custom_call.1} parent=1 // pred_check
      _
    $region27: #{tpu_custom_call.1} parent=1 // pred_check_branch
      %28 = sbr.rel (0) target = $region29
    $region28: #{tpu_custom_call.1} parent=1 // pred_region
      _
    $region29: #{tpu_custom_call.1} parent=1 // pred_fallthru
      _
    %v29 = vld [vmem:[%s0] sm:$0xff]
    %v30 = vld [vmem:[%s0 + $0x8] sm:$0xff]
    %v31 = vlaneseq
    %v32 = vshrl.u32 %v31, 7
    %v33 = vadd.s32 %v32, 8
    %vm34 = vcmp.lt.s32.totalorder %v32, 0
    %v35 = vsub.s32 0, %v32
    %v36 = vsel %vm34, %v35, %v32
    %v37 = vshrl.u32 %v36, 3
    %v38 = vand.u32 %v36, 7
    %v39 = vsub.s32 0, %v38
    %v40 = vsel %vm34, %v39, %v38
    %vm41 = vcmp.lt.s32.totalorder %v33, 0
    %v42 = vsub.s32 0, %v33
    %v43 = vsel %vm41, %v42, %v33
    %v44 = vshrl.u32 %v43, 3
    %v45 = vand.u32 %v43, 7
    %v46 = vsub.s32 0, %v45
    %v47 = vsel %vm41, %v46, %v45
    %vm48 = vcmp.ne.s32.totalorder %v40, 0
    %vm49 = vcmp.ne.s32.totalorder %v47, 0
    %vm50 = vcmp.lt.s32.totalorder %v40, 0
    %vm51 = vcmp.lt.s32.totalorder %v47, 0
    %vm52 = vmand %vm50, %vm48
    %vm53 = vmand %vm51, %vm49
    %v54 = vadd.s32 %v40, 8
    %v55 = vadd.s32 %v47, 8
    %v56 = vsel %vm52, %v54, %v40
    %v57 = vsel %vm53, %v55, %v47
    %v58 = vrot.slane %v29, 7
    %v59 = vrot.slane %v30, 7
    %vm60 = vcmp.lt.s32.totalorder %v32, 1
    %v61 = vsel %vm60, %v58, %v59
    %v62 = vsel %vm60, %v59, %v58
    %vm63 = vcmp.ge.s32.totalorder %v56, 1
    %vm64 = vcmp.ge.s32.totalorder %v57, 1
    %v65 = vsel %vm63, 1, 0
    %v66 = vsel %vm64, 1, 0
    %vm67 = vcmp.eq.s32.totalorder %v65, 1
    %vm68 = vcmp.eq.s32.totalorder %v66, 1
    %v69 = vsel %vm67, %v62, 0.0
    %v70 = vsel %vm68, %v61, 0.0
    %v71 = vadd.f32 %v29, %v69
    %v72 = vadd.f32 %v30, %v70
    %v73 = vrot.slane %v71, 6
    %v74 = vrot.slane %v72, 6
    %vm75 = vcmp.lt.s32.totalorder %v32, 2
    %v76 = vsel %vm75, %v73, %v74
    %v77 = vsel %vm75, %v74, %v73
    %vm78 = vcmp.ge.s32.totalorder %v56, 2
    %vm79 = vcmp.ge.s32.totalorder %v57, 2
    %v80 = vsel %vm78, 1, 0
    %v81 = vsel %vm79, 1, 0
    %vm82 = vcmp.eq.s32.totalorder %v80, 1
    %vm83 = vcmp.eq.s32.totalorder %v81, 1
    %v84 = vsel %vm82, %v77, 0.0
    %v85 = vsel %vm83, %v76, 0.0
    %v86 = vadd.f32 %v71, %v84
    %v87 = vadd.f32 %v72, %v85
    %v88 = vrot.slane %v86, 4
    %v89 = vrot.slane %v87, 4
    %vm90 = vcmp.lt.s32.totalorder %v32, 4
    %v91 = vsel %vm90, %v88, %v89
    %v92 = vsel %vm90, %v89, %v88
    %vm93 = vcmp.ge.s32.totalorder %v56, 4
    %vm94 = vcmp.ge.s32.totalorder %v57, 4
    %v95 = vsel %vm93, 1, 0
    %v96 = vsel %vm94, 1, 0
    %vm97 = vcmp.eq.s32.totalorder %v95, 1
    %vm98 = vcmp.eq.s32.totalorder %v96, 1
    %v99 = vsel %vm97, %v92, 0.0
    %v100 = vsel %vm98, %v91, 0.0
    %v101 = vadd.f32 %v86, %v99
    %v102 = vadd.f32 %v87, %v100
    %v103 = vld [vmem:[%s1] sm:$0xff]
    %v104 = vld [vmem:[%s1 + $0x8] sm:$0xff]
    %v105 = vld [vmem:[%s1 + $0x10] sm:$0xff]
    %v106 = vld [vmem:[%s1 + $0x18] sm:$0xff]
    %v107 = vld [vmem:[%s1 + $0x20] sm:$0xff]
    %v108 = vld [vmem:[%s1 + $0x28] sm:$0xff]
    %v109 = vld [vmem:[%s1 + $0x30] sm:$0xff]
    %v110 = vld [vmem:[%s1 + $0x38] sm:$0xff]
    %v111 = vld [vmem:[%s1 + $0x40] sm:$0xff]
    %v112 = vld [vmem:[%s1 + $0x48] sm:$0xff]
    %v113 = vld [vmem:[%s1 + $0x50] sm:$0xff]
    %v114 = vld [vmem:[%s1 + $0x58] sm:$0xff]
    %v115 = vld [vmem:[%s1 + $0x60] sm:$0xff]
    %v116 = vld [vmem:[%s1 + $0x68] sm:$0xff]
    %v117 = vld [vmem:[%s1 + $0x70] sm:$0xff]
    %v118 = vld [vmem:[%s1 + $0x78] sm:$0xff]
    %v119 = vld [vmem:[%s2] sm:$0x1]
    %v121 = vperm.slane %v119, 0
    %123 = vmatpush.msra.mxu0 %v118
    %124 = vmatpush.msra.mxu0 %v117
    %125 = vmatpush.msra.mxu0 %v116
    %126 = vmatpush.msra.mxu0 %v115
    %127 = vmatpush.msra.mxu0 %v114
    %128 = vmatpush.msra.mxu0 %v113
    %129 = vmatpush.msra.mxu0 %v112
    %130 = vmatpush.msra.mxu0 %v111
    %131 = vmatpush.msra.mxu0 %v110
    %132 = vmatpush.msra.mxu0 %v109
    %133 = vmatpush.msra.mxu0 %v108
    %134 = vmatpush.msra.mxu0 %v107
    %135 = vmatpush.msra.mxu0 %v106
    %136 = vmatpush.msra.mxu0 %v105
    %137 = vmatpush.msra.mxu0 %v104
    %138 = vmatpush.msra.mxu0 %v103
    %139 = vmatmul.f32.gmra.mxu0 %v101
    %v140 = vpop.f32.mrf.mxu0
    %v141 = vadd.f32 %v121, %v140
    %142 = vmatmul.f32.gmra.mxu0 %v102
    %v143 = vpop.f32.mrf.mxu0
    %v144 = vadd.f32 %v121, %v143
    %145 = vdwg.mxu0
    %v146 = vmax.f32 %v141, 0.0
    %v147 = vmax.f32 %v144, 0.0
    %v148 = vld [vmem:[%s3] sm:$0xff]
    %v149 = vld [vmem:[%s3 + $0x8] sm:$0xff]
    %v150 = vld [vmem:[%s3 + $0x10] sm:$0xff]
    %v151 = vld [vmem:[%s3 + $0x18] sm:$0xff]
    %v152 = vld [vmem:[%s3 + $0x20] sm:$0xff]
    %v153 = vld [vmem:[%s3 + $0x28] sm:$0xff]
    %v154 = vld [vmem:[%s3 + $0x30] sm:$0xff]
    %v155 = vld [vmem:[%s3 + $0x38] sm:$0xff]
    %v156 = vld [vmem:[%s3 + $0x40] sm:$0xff]
    %v157 = vld [vmem:[%s3 + $0x48] sm:$0xff]
    %v158 = vld [vmem:[%s3 + $0x50] sm:$0xff]
    %v159 = vld [vmem:[%s3 + $0x58] sm:$0xff]
    %v160 = vld [vmem:[%s3 + $0x60] sm:$0xff]
    %v161 = vld [vmem:[%s3 + $0x68] sm:$0xff]
    %v162 = vld [vmem:[%s3 + $0x70] sm:$0xff]
    %v163 = vld [vmem:[%s3 + $0x78] sm:$0xff]
    %v164 = vld [vmem:[%s4] sm:$0x1]
    %v166 = vperm.slane %v164, 0
    %168 = vmatpush.msra.mxu0 %v163
    %169 = vmatpush.msra.mxu0 %v162
    %170 = vmatpush.msra.mxu0 %v161
    %171 = vmatpush.msra.mxu0 %v160
    %172 = vmatpush.msra.mxu0 %v159
    %173 = vmatpush.msra.mxu0 %v158
    %174 = vmatpush.msra.mxu0 %v157
    %175 = vmatpush.msra.mxu0 %v156
    %176 = vmatpush.msra.mxu0 %v155
    %177 = vmatpush.msra.mxu0 %v154
    %178 = vmatpush.msra.mxu0 %v153
    %179 = vmatpush.msra.mxu0 %v152
    %180 = vmatpush.msra.mxu0 %v151
    %181 = vmatpush.msra.mxu0 %v150
    %182 = vmatpush.msra.mxu0 %v149
    %183 = vmatpush.msra.mxu0 %v148
    %184 = vmatmul.f32.gmra.mxu0 %v146
    %v185 = vpop.f32.mrf.mxu0
    %v186 = vadd.f32 %v166, %v185
    %187 = vmatmul.f32.gmra.mxu0 %v147
    %v188 = vpop.f32.mrf.mxu0
    %v189 = vadd.f32 %v166, %v188
    %190 = vdwg.mxu0
    %v191 = vmax.f32 %v186, 0.0
    %v192 = vmax.f32 %v189, 0.0
    %v193 = vld [vmem:[%s5] sm:$0x1]
    %v195 = vperm.slane %v193, 0
    %v197 = vmul.f32 %v191, %v195
    %v198 = vmul.f32 %v192, %v195
    %vm199 = vcmask 523264
    %v200 = vsel %vm199, %v197, 0.0
    %201 = vadd.xlane.f32.xlu0 %v200
    %v202 = vpop.xlane.xlu0 %201
    %v203 = vsel %vm199, %v198, 0.0
    %204 = vadd.xlane.f32.xlu0 %v203
    %v205 = vpop.xlane.xlu0 %204
    %v206 = vld [vmem:[#allocation2] sm:$0x1]
    %v208 = vperm.slane %v206, 0
    %209 = vset.pattern.permute.xlu0 0
    %210 = vperm.xlu0 %209, %v208
    %v211 = vpop.permute.xlu0 %210
    %v213 = vadd.f32 %v202, %v211
    %v214 = vadd.f32 %v205, %v211
    %v217 = vlaneseq
    %v218 = vand.u32 %v217, 127
    %v219 = vperm.slane %v213, %v218
    %v220 = vperm.slane %v214, %v218
    %vm221 = vcmask 1041409
    %v222 = vsel %vm221, %v220, %v219
    %vm224 = vcmask 58368
    %225 = vst.msk [vmem:[#allocation3] sm:$0x3] %vm224, %v222
    // Predicated region
    $region30: #{tpu_custom_call.1} parent=1 // pred_check
      _
    $region31: #{tpu_custom_call.1} parent=1 // pred_check_branch
      %227 = sbr.rel (0) target = $region33
    $region32: #{tpu_custom_call.1} parent=1 // pred_region
      %229 = vsyncadd [#allocation4], 0
      %s231 = sshll.u32 [#allocation3], 4
      %s232 = int_to_ptr.vmem [resolvable:$true] %s231
      %s233 = sshll.u32 %s7, 4
      %s234 = int_to_ptr.hbm [resolvable:$true] %s233
      %236 = dma.vmem_to_hbm [thread:$0]  %s232, 32, %s234, [#allocation4]
    $region33: #{tpu_custom_call.1} parent=1 // pred_fallthru
      _
    // Predicated region
    $region34: #{tpu_custom_call.1} parent=1 // pred_check
      _
    $region35: #{tpu_custom_call.1} parent=1 // pred_check_branch
      %238 = sbr.rel (0) target = $region37
    $region36: #{tpu_custom_call.1} parent=1 // pred_region
      %240 = dma.done [#allocation4], 32
    $region37: #{tpu_custom_call.1} parent=1 // pred_fallthru
      _
    %241 = vsyncpa [#allocation4], 1

</llo_original>
